<compile_context>
chip_gen: v7x
topology: tpu7x:2x2x1
jax: 0.10.0
libtpu: 0.0.40
codegen_flags: <defaults>
</compile_context>

<pallas_src>
import jax
import jax.numpy as jnp
from jax.experimental import pallas as pl
from jax.experimental.pallas import tpu as pltpu

LEAKY_SLOPE = 0.01  # nn.LeakyReLU default negative_slope


def _leaky_relu(v):
    # max(v, 0.01*v) == LeakyReLU(v) for slope < 1 (one mul + one max on VALU).
    return jnp.maximum(v, LEAKY_SLOPE * v)


def _sigmoid_kernel(v):
    # exp and the approximate reciprocal both run on the EUP slot.
    return pl.reciprocal(1.0 + jnp.exp(-v), approx=True)


def gae_kernel(xt_ref, w_ref, b_ref, o_ref):
    """Fused GAE forward on one batch tile.

    xt_ref : (H, TN)    activations, features on sublanes, batch on lanes
    w_ref  : (6, H, H)  packed transposed weights (zero-padded), adj_A folded
                        into layer 3 (first decoder layer)
    b_ref  : (6, H, 1)  packed biases (zero-padded)
    o_ref  : (d, TN)    transposed output tile
    """
    h = xt_ref[...]

    # --- encoder ---
    h = _leaky_relu(jnp.dot(w_ref[0], h, preferred_element_type=jnp.float32) + b_ref[0])
    h = _leaky_relu(jnp.dot(w_ref[1], h, preferred_element_type=jnp.float32) + b_ref[1])
    h = _sigmoid_kernel(jnp.dot(w_ref[2], h, preferred_element_type=jnp.float32) + b_ref[2])

    # --- decoder (graph-mixing matmul already folded into w_ref[3]) ---
    h = _leaky_relu(jnp.dot(w_ref[3], h, preferred_element_type=jnp.float32) + b_ref[3])
    h = _leaky_relu(jnp.dot(w_ref[4], h, preferred_element_type=jnp.float32) + b_ref[4])
    h = _sigmoid_kernel(jnp.dot(w_ref[5], h, preferred_element_type=jnp.float32) + b_ref[5])

    # Keep only the real (unpadded) feature rows.
    o_ref[...] = h[: o_ref.shape[0], :]


def _round_up(n, m):
    return ((n + m - 1) // m) * m


def gae_forward(x, params, *, max_batch_tile=512):
    """Wrapper: lane-dense transposed layout, batch-tiled grid, packed weights."""
    N, d = x.shape
    hidden = params["we1"].shape[1]
    H = max(d, hidden)                       # common padded feature width
    f32 = jnp.float32

    tile = min(max_batch_tile, _round_up(N, 128))
    Npad = _round_up(N, tile)

    # Fold graph mixing into the first decoder layer (exact algebraic identity;
    # recomputed every call so a trainable adj_A stays correct).
    wd1_mixed = params["adj_A"] @ params["wd1"]          # (d, hidden)

    def pack_w(w):           # (in, out) -> transposed, zero-padded (H, H)
        wt = w.T
        return jnp.zeros((H, H), f32).at[: wt.shape[0], : wt.shape[1]].set(wt)

    def pack_b(b):           # (1, out) -> zero-padded column (H, 1)
        bc = b.reshape(-1, 1)
        return jnp.zeros((H, 1), f32).at[: bc.shape[0], :].set(bc)

    w_pack = jnp.stack([pack_w(params["we1"]), pack_w(params["we2"]),
                        pack_w(params["we3"]), pack_w(wd1_mixed),
                        pack_w(params["wd2"]), pack_w(params["wd3"])])   # (6, H, H)
    b_pack = jnp.stack([pack_b(params["be1"]), pack_b(params["be2"]),
                        pack_b(params["be3"]), pack_b(params["bd1"]),
                        pack_b(params["bd2"]), pack_b(params["bd3"])])   # (6, H, 1)

    # Lane-dense transposed activations: features on sublanes, batch on lanes.
    xt = jnp.zeros((H, Npad), f32).at[:d, :N].set(x.T)

    grid = (Npad // tile,)
    flops = 2 * Npad * 6 * H * H
    transcendentals = 4 * Npad * H
    bytes_accessed = 4 * (xt.size + w_pack.size + b_pack.size + d * Npad)

    out_t = pl.pallas_call(
        gae_kernel,
        out_shape=jax.ShapeDtypeStruct((d, Npad), f32),
        grid=grid,
        in_specs=[
            pl.BlockSpec((H, tile), lambda i: (0, i)),      # activations: new tile per step
            pl.BlockSpec((6, H, H), lambda i: (0, 0, 0)),   # weights: resident across steps
            pl.BlockSpec((6, H, 1), lambda i: (0, 0, 0)),   # biases: resident across steps
        ],
        out_specs=pl.BlockSpec((d, tile), lambda i: (0, i)),
        compiler_params=pltpu.CompilerParams(
            dimension_semantics=("parallel",)),             # split batch tiles across TCs (v7x)
        cost_estimate=pl.CostEstimate(flops=flops,
                                      transcendentals=transcendentals,
                                      bytes_accessed=bytes_accessed),
    )(xt, w_pack, b_pack)

    return out_t[:, :N].T


def init_params(key, d, hidden):
    """Deterministic parameter init mirroring the PyTorch module's shapes."""
    keys = jax.random.split(key, 13)

    def linear(kw, kb, fan_in, fan_out):
        bound = 1.0 / jnp.sqrt(jnp.float32(fan_in))
        w = jax.random.uniform(kw, (fan_in, fan_out), jnp.float32, -bound, bound)
        b = jax.random.uniform(kb, (1, fan_out), jnp.float32, -bound, bound)
        return w, b

    we1, be1 = linear(keys[0], keys[1], d, hidden)
    we2, be2 = linear(keys[2], keys[3], hidden, hidden)
    we3, be3 = linear(keys[4], keys[5], hidden, d)
    wd1, bd1 = linear(keys[6], keys[7], d, hidden)
    wd2, bd2 = linear(keys[8], keys[9], hidden, hidden)
    wd3, bd3 = linear(keys[10], keys[11], hidden, d)

    # adj_A = -0.1 + randn(d, d) / d, with zeroed diagonal (as in the module).
    adj_A = -0.1 + jax.random.normal(keys[12], (d, d), jnp.float32) * (1.0 / d)
    adj_A = adj_A * (1.0 - jnp.eye(d, dtype=jnp.float32))

    return {"we1": we1, "be1": be1, "we2": we2, "be2": be2,
            "we3": we3, "be3": be3, "adj_A": adj_A,
            "wd1": wd1, "bd1": bd1, "wd2": wd2, "bd2": bd2,
            "wd3": wd3, "bd3": bd3}


def gae_forward_reference(x, p):
    """Plain-JAX reference (un-folded adj_A, exact sigmoid) for correctness checks."""
    def leaky(v):
        return jnp.where(v > 0, v, LEAKY_SLOPE * v)

    h = leaky(x @ p["we1"] + p["be1"])
    h = leaky(h @ p["we2"] + p["be2"])
    z = jax.nn.sigmoid(h @ p["we3"] + p["be3"])
    z = z @ p["adj_A"]
    h = leaky(z @ p["wd1"] + p["bd1"])
    h = leaky(h @ p["wd2"] + p["bd2"])
    return jax.nn.sigmoid(h @ p["wd3"] + p["bd3"])


if __name__ == "__main__":
    d = 16
    hidden = 32
    batch = 8

    key = jax.random.PRNGKey(0)
    key_x, key_p = jax.random.split(key)

    x = jax.random.normal(key_x, (batch, d), jnp.float32)
    params = init_params(key_p, d, hidden)

    out = jax.block_until_ready(gae_forward(x, params))
    ref = gae_forward_reference(x, params)

    assert out.shape == (batch, d), out.shape
    # Tolerance accounts for the EUP approximate reciprocal in the in-kernel sigmoid.
    assert jnp.allclose(out, ref, atol=1e-2, rtol=1e-2), \
        float(jnp.max(jnp.abs(out - ref)))

    print("KERNEL_OK")
</pallas_src>

<mosaic_0001>
module attributes {stable_mosaic.version = 11 : i64} {
  func.func @gae_kernel(%arg0: i32, %arg1: memref<32x128xf32, #tpu.memory_space<vmem>>, %arg2: memref<6x32x32xf32, #tpu.memory_space<vmem>>, %arg3: memref<6x32x1xf32, #tpu.memory_space<vmem>>, %arg4: memref<16x128xf32, #tpu.memory_space<vmem>>) attributes {dimension_semantics = [#tpu.dimension_semantics<parallel>], iteration_bounds = array<i64: 1>, scalar_prefetch = 0 : i64, scratch_operands = 0 : i64, tpu.core_type = #tpu.core_type<tc>, window_params = [{transform_indices = @transform_0, window_bounds = array<i64: 32, 128>}, {pipeline_mode = #tpu.pipeline_mode<synchronous>, transform_indices = @transform_1, window_bounds = array<i64: 6, 32, 32>}, {pipeline_mode = #tpu.pipeline_mode<synchronous>, transform_indices = @transform_2, window_bounds = array<i64: 6, 32, 1>}, {transform_indices = @transform_3, window_bounds = array<i64: 16, 128>}]} {
    %c0 = arith.constant 0 : index
    %c0_0 = arith.constant 0 : index
    %0 = vector.load %arg1[%c0, %c0_0] : memref<32x128xf32, #tpu.memory_space<vmem>>, vector<32x128xf32>
    %c0_1 = arith.constant 0 : index
    %c0_2 = arith.constant 0 : index
    %c0_3 = arith.constant 0 : index
    %1 = vector.load %arg2[%c0_1, %c0_2, %c0_3] : memref<6x32x32xf32, #tpu.memory_space<vmem>>, vector<1x32x32xf32>
    %2 = vector.shape_cast %1 : vector<1x32x32xf32> to vector<32x32xf32>
    %cst = arith.constant dense<0.000000e+00> : vector<32x128xf32>
    %3 = tpu.matmul %2, %0, %cst {dimension_numbers = #tpu.dot_dimension_numbers<[1], [0], [0], [1], [0, 0, 1, 1], [], []>} : vector<32x32xf32>, vector<32x128xf32>, vector<32x128xf32> -> vector<32x128xf32>
    %c0_4 = arith.constant 0 : index
    %c0_5 = arith.constant 0 : index
    %c0_6 = arith.constant 0 : index
    %4 = vector.load %arg3[%c0_4, %c0_5, %c0_6] : memref<6x32x1xf32, #tpu.memory_space<vmem>>, vector<1x32x1xf32>
    %5 = vector.shape_cast %4 : vector<1x32x1xf32> to vector<32x1xf32>
    %6 = vector.broadcast %5 : vector<32x1xf32> to vector<32x128xf32>
    %7 = arith.addf %3, %6 : vector<32x128xf32>
    %cst_7 = arith.constant 0.00999999977 : f32
    %8 = vector.broadcast %cst_7 : f32 to vector<32x128xf32>
    %9 = arith.mulf %8, %7 : vector<32x128xf32>
    %10 = arith.maximumf %7, %9 : vector<32x128xf32>
    %c1 = arith.constant 1 : index
    %c0_8 = arith.constant 0 : index
    %c0_9 = arith.constant 0 : index
    %11 = vector.load %arg2[%c1, %c0_8, %c0_9] : memref<6x32x32xf32, #tpu.memory_space<vmem>>, vector<1x32x32xf32>
    %12 = vector.shape_cast %11 : vector<1x32x32xf32> to vector<32x32xf32>
    %cst_10 = arith.constant dense<0.000000e+00> : vector<32x128xf32>
    %13 = tpu.matmul %12, %10, %cst_10 {dimension_numbers = #tpu.dot_dimension_numbers<[1], [0], [0], [1], [0, 0, 1, 1], [], []>} : vector<32x32xf32>, vector<32x128xf32>, vector<32x128xf32> -> vector<32x128xf32>
    %c1_11 = arith.constant 1 : index
    %c0_12 = arith.constant 0 : index
    %c0_13 = arith.constant 0 : index
    %14 = vector.load %arg3[%c1_11, %c0_12, %c0_13] : memref<6x32x1xf32, #tpu.memory_space<vmem>>, vector<1x32x1xf32>
    %15 = vector.shape_cast %14 : vector<1x32x1xf32> to vector<32x1xf32>
    %16 = vector.broadcast %15 : vector<32x1xf32> to vector<32x128xf32>
    %17 = arith.addf %13, %16 : vector<32x128xf32>
    %cst_14 = arith.constant 0.00999999977 : f32
    %18 = vector.broadcast %cst_14 : f32 to vector<32x128xf32>
    %19 = arith.mulf %18, %17 : vector<32x128xf32>
    %20 = arith.maximumf %17, %19 : vector<32x128xf32>
    %c2 = arith.constant 2 : index
    %c0_15 = arith.constant 0 : index
    %c0_16 = arith.constant 0 : index
    %21 = vector.load %arg2[%c2, %c0_15, %c0_16] : memref<6x32x32xf32, #tpu.memory_space<vmem>>, vector<1x32x32xf32>
    %22 = vector.shape_cast %21 : vector<1x32x32xf32> to vector<32x32xf32>
    %cst_17 = arith.constant dense<0.000000e+00> : vector<32x128xf32>
    %23 = tpu.matmul %22, %20, %cst_17 {dimension_numbers = #tpu.dot_dimension_numbers<[1], [0], [0], [1], [0, 0, 1, 1], [], []>} : vector<32x32xf32>, vector<32x128xf32>, vector<32x128xf32> -> vector<32x128xf32>
    %c2_18 = arith.constant 2 : index
    %c0_19 = arith.constant 0 : index
    %c0_20 = arith.constant 0 : index
    %24 = vector.load %arg3[%c2_18, %c0_19, %c0_20] : memref<6x32x1xf32, #tpu.memory_space<vmem>>, vector<1x32x1xf32>
    %25 = vector.shape_cast %24 : vector<1x32x1xf32> to vector<32x1xf32>
    %26 = vector.broadcast %25 : vector<32x1xf32> to vector<32x128xf32>
    %27 = arith.addf %23, %26 : vector<32x128xf32>
    %cst_21 = arith.constant 0.000000e+00 : f32
    %28 = vector.broadcast %cst_21 : f32 to vector<32x128xf32>
    %29 = arith.subf %28, %27 : vector<32x128xf32>
    %30 = math.exp %29 : vector<32x128xf32>
    %cst_22 = arith.constant 1.000000e+00 : f32
    %31 = vector.broadcast %cst_22 : f32 to vector<32x128xf32>
    %32 = arith.addf %31, %30 : vector<32x128xf32>
    %33 = tpu.reciprocal %32 {approx = true} : vector<32x128xf32> -> vector<32x128xf32>
    %c3 = arith.constant 3 : index
    %c0_23 = arith.constant 0 : index
    %c0_24 = arith.constant 0 : index
    %34 = vector.load %arg2[%c3, %c0_23, %c0_24] : memref<6x32x32xf32, #tpu.memory_space<vmem>>, vector<1x32x32xf32>
    %35 = vector.shape_cast %34 : vector<1x32x32xf32> to vector<32x32xf32>
    %cst_25 = arith.constant dense<0.000000e+00> : vector<32x128xf32>
    %36 = tpu.matmul %35, %33, %cst_25 {dimension_numbers = #tpu.dot_dimension_numbers<[1], [0], [0], [1], [0, 0, 1, 1], [], []>} : vector<32x32xf32>, vector<32x128xf32>, vector<32x128xf32> -> vector<32x128xf32>
    %c3_26 = arith.constant 3 : index
    %c0_27 = arith.constant 0 : index
    %c0_28 = arith.constant 0 : index
    %37 = vector.load %arg3[%c3_26, %c0_27, %c0_28] : memref<6x32x1xf32, #tpu.memory_space<vmem>>, vector<1x32x1xf32>
    %38 = vector.shape_cast %37 : vector<1x32x1xf32> to vector<32x1xf32>
    %39 = vector.broadcast %38 : vector<32x1xf32> to vector<32x128xf32>
    %40 = arith.addf %36, %39 : vector<32x128xf32>
    %cst_29 = arith.constant 0.00999999977 : f32
    %41 = vector.broadcast %cst_29 : f32 to vector<32x128xf32>
    %42 = arith.mulf %41, %40 : vector<32x128xf32>
    %43 = arith.maximumf %40, %42 : vector<32x128xf32>
    %c4 = arith.constant 4 : index
    %c0_30 = arith.constant 0 : index
    %c0_31 = arith.constant 0 : index
    %44 = vector.load %arg2[%c4, %c0_30, %c0_31] : memref<6x32x32xf32, #tpu.memory_space<vmem>>, vector<1x32x32xf32>
    %45 = vector.shape_cast %44 : vector<1x32x32xf32> to vector<32x32xf32>
    %cst_32 = arith.constant dense<0.000000e+00> : vector<32x128xf32>
    %46 = tpu.matmul %45, %43, %cst_32 {dimension_numbers = #tpu.dot_dimension_numbers<[1], [0], [0], [1], [0, 0, 1, 1], [], []>} : vector<32x32xf32>, vector<32x128xf32>, vector<32x128xf32> -> vector<32x128xf32>
    %c4_33 = arith.constant 4 : index
    %c0_34 = arith.constant 0 : index
    %c0_35 = arith.constant 0 : index
    %47 = vector.load %arg3[%c4_33, %c0_34, %c0_35] : memref<6x32x1xf32, #tpu.memory_space<vmem>>, vector<1x32x1xf32>
    %48 = vector.shape_cast %47 : vector<1x32x1xf32> to vector<32x1xf32>
    %49 = vector.broadcast %48 : vector<32x1xf32> to vector<32x128xf32>
    %50 = arith.addf %46, %49 : vector<32x128xf32>
    %cst_36 = arith.constant 0.00999999977 : f32
    %51 = vector.broadcast %cst_36 : f32 to vector<32x128xf32>
    %52 = arith.mulf %51, %50 : vector<32x128xf32>
    %53 = arith.maximumf %50, %52 : vector<32x128xf32>
    %c5 = arith.constant 5 : index
    %c0_37 = arith.constant 0 : index
    %c0_38 = arith.constant 0 : index
    %54 = vector.load %arg2[%c5, %c0_37, %c0_38] : memref<6x32x32xf32, #tpu.memory_space<vmem>>, vector<1x32x32xf32>
    %55 = vector.shape_cast %54 : vector<1x32x32xf32> to vector<32x32xf32>
    %cst_39 = arith.constant dense<0.000000e+00> : vector<32x128xf32>
    %56 = tpu.matmul %55, %53, %cst_39 {dimension_numbers = #tpu.dot_dimension_numbers<[1], [0], [0], [1], [0, 0, 1, 1], [], []>} : vector<32x32xf32>, vector<32x128xf32>, vector<32x128xf32> -> vector<32x128xf32>
    %c5_40 = arith.constant 5 : index
    %c0_41 = arith.constant 0 : index
    %c0_42 = arith.constant 0 : index
    %57 = vector.load %arg3[%c5_40, %c0_41, %c0_42] : memref<6x32x1xf32, #tpu.memory_space<vmem>>, vector<1x32x1xf32>
    %58 = vector.shape_cast %57 : vector<1x32x1xf32> to vector<32x1xf32>
    %59 = vector.broadcast %58 : vector<32x1xf32> to vector<32x128xf32>
    %60 = arith.addf %56, %59 : vector<32x128xf32>
    %cst_43 = arith.constant 0.000000e+00 : f32
    %61 = vector.broadcast %cst_43 : f32 to vector<32x128xf32>
    %62 = arith.subf %61, %60 : vector<32x128xf32>
    %63 = math.exp %62 : vector<32x128xf32>
    %cst_44 = arith.constant 1.000000e+00 : f32
    %64 = vector.broadcast %cst_44 : f32 to vector<32x128xf32>
    %65 = arith.addf %64, %63 : vector<32x128xf32>
    %66 = tpu.reciprocal %65 {approx = true} : vector<32x128xf32> -> vector<32x128xf32>
    %67 = vector.extract_strided_slice %66 {offsets = [0, 0], sizes = [16, 128], strides = [1, 1]} : vector<32x128xf32> to vector<16x128xf32>
    %c0_45 = arith.constant 0 : index
    %c0_46 = arith.constant 0 : index
    %68 = vector.load %arg4[%c0_45, %c0_46] : memref<16x128xf32, #tpu.memory_space<vmem>>, vector<16x128xf32>
    tpu.vector_store %arg4[%c0_45, %c0_46], %67 {strides = array<i32>} : memref<16x128xf32, #tpu.memory_space<vmem>>, vector<16x128xf32>,
    return
  }
  func.func @transform_0(%arg0: i32) -> (i32, i32) {
    %c0_i32 = arith.constant 0 : i32
    %c0_i32_0 = arith.constant 0 : i32
    return %c0_i32, %arg0 : i32, i32
  }
  func.func @transform_1(%arg0: i32) -> (i32, i32, i32) {
    %c0_i32 = arith.constant 0 : i32
    %c0_i32_0 = arith.constant 0 : i32
    %c0_i32_1 = arith.constant 0 : i32
    %c0_i32_2 = arith.constant 0 : i32
    return %c0_i32, %c0_i32_0, %c0_i32_1 : i32, i32, i32
  }
  func.func @transform_2(%arg0: i32) -> (i32, i32, i32) {
    %c0_i32 = arith.constant 0 : i32
    %c0_i32_0 = arith.constant 0 : i32
    %c0_i32_1 = arith.constant 0 : i32
    %c0_i32_2 = arith.constant 0 : i32
    return %c0_i32, %c0_i32_0, %c0_i32_1 : i32, i32, i32
  }
  func.func @transform_3(%arg0: i32) -> (i32, i32) {
    %c0_i32 = arith.constant 0 : i32
    %c0_i32_0 = arith.constant 0 : i32
    return %c0_i32, %arg0 : i32, i32
  }
}

</mosaic_0001>

<llo_original>
// kernel: tpu_custom_call.1
$region0: #{tpu_custom_call.1}
  #allocation0 [shape = 'u32[]', space=smem, size = 0x4, offset = 0x4, fixed_abs, tag = 'smem constant byte address 0x4 - core index']
  #allocation1 [shape = 'u32[144,128]{1,0:T(1,128)}', space=vmem, size = 0x12000, scoped, tag = 'internal scratch']
  %s0 = inlined_call_operand.hbm [shape: f32[32,128], index: 0, kind: input, shape index: {}]
  %s1 = inlined_call_operand.vmem [shape: f32[6,32,32], index: 1, kind: input, shape index: {}]
  %s2 = inlined_call_operand.vmem [shape: f32[6,32,1], index: 2, kind: input, shape index: {}]
  %s3 = inlined_call_operand.hbm [shape: f32[16,128], index: 3, kind: output, shape index: {}]
  %s4 = sld [smem:[#allocation0]]
  $region26: #{tpu_custom_call.1} parent=0
    _
  %s6 = ssub.s32 1, %s4
  %s7 = scalar_select 0, %s6, %s4
  $region1: #{tpu_custom_call.1} parent=0
    #allocation2 [shape = 'u8[16384]{0}', space=vmem, size = 0x4000, scoped, tag = 'input window, operand 0, single buffered']
    #allocation3 [shape = 's32[1]{0}', space=sflag, size = 0x4, scoped, tag = 'scoped memory for tpu_custom_call.1']
    #allocation4 [shape = 's32[1]{0}', space=sflag, size = 0x4, scoped, tag = 'scoped memory for tpu_custom_call.1']
    #allocation5 [shape = 'u8[8192]{0}', space=vmem, size = 0x2000, scoped, tag = 'output window, operand 0, single buffered']
    %8 = vsyncpa [#allocation3], 0
    %9 = vsyncpa [#allocation4], 0
    // Predicated region
    $region2: #{tpu_custom_call.1} parent=1 // pred_check
      _
    $region3: #{tpu_custom_call.1} parent=1 // pred_check_branch
      %11 = sbr.rel (0) target = $region5
    $region4: #{tpu_custom_call.1} parent=1 // pred_region
      %s13 = ssub.s32 512, 512
      %14 = vsyncadd [#allocation3], %s13
      %s15 = sshll.u32 [#allocation2], 4
      %s16 = int_to_ptr.vmem [resolvable:$true] %s15
      %21 = dma.hbm_to_vmem [thread:$0]  %s0, 512, %s16, [#allocation3], 128, 128, 8
    $region5: #{tpu_custom_call.1} parent=1 // pred_fallthru
      _
    // Predicated region
    $region6: #{tpu_custom_call.1} parent=1 // pred_check
      _
    $region7: #{tpu_custom_call.1} parent=1 // pred_check_branch
      %23 = sbr.rel (0) target = $region9
    $region8: #{tpu_custom_call.1} parent=1 // pred_region
      _
    $region9: #{tpu_custom_call.1} parent=1 // pred_fallthru
      _
    // Predicated region
    $region10: #{tpu_custom_call.1} parent=1 // pred_check
      _
    $region11: #{tpu_custom_call.1} parent=1 // pred_check_branch
      %25 = sbr.rel (0) target = $region13
    $region12: #{tpu_custom_call.1} parent=1 // pred_region
      _
    $region13: #{tpu_custom_call.1} parent=1 // pred_fallthru
      _
    // Predicated region
    $region14: #{tpu_custom_call.1} parent=1 // pred_check
      _
    $region15: #{tpu_custom_call.1} parent=1 // pred_check_branch
      %27 = sbr.rel (0) target = $region17
    $region16: #{tpu_custom_call.1} parent=1 // pred_region
      %28 = dma.done [#allocation3], 512
    $region17: #{tpu_custom_call.1} parent=1 // pred_fallthru
      _
    %v29 = vld [vmem:[#allocation2] sm:$0xff]
    %v30 = vld [vmem:[#allocation2 + $0x8] sm:$0xff]
    %v31 = vld [vmem:[#allocation2 + $0x10] sm:$0xff]
    %v32 = vld [vmem:[#allocation2 + $0x18] sm:$0xff]
    %v33 = vld [vmem:[%s1] sm:$0xff]
    %v34 = vld [vmem:[%s1 + $0x8] sm:$0xff]
    %v35 = vld [vmem:[%s1 + $0x10] sm:$0xff]
    %v36 = vld [vmem:[%s1 + $0x18] sm:$0xff]
    %v37 = vld [vmem:[%s2] sm:$0xff]
    %v38 = vld [vmem:[%s2 + $0x8] sm:$0xff]
    %v39 = vld [vmem:[%s2 + $0x10] sm:$0xff]
    %v40 = vld [vmem:[%s2 + $0x18] sm:$0xff]
    %42 = vset.pattern.permute.xlu0 0
    %43 = vperm.xlu0 %42, %v37
    %v44 = vpop.permute.xlu0 %43
    %47 = vset.pattern.permute.xlu0 0
    %48 = vperm.xlu0 %47, %v38
    %v49 = vpop.permute.xlu0 %48
    %52 = vset.pattern.permute.xlu0 0
    %53 = vperm.xlu0 %52, %v39
    %v54 = vpop.permute.xlu0 %53
    %57 = vset.pattern.permute.xlu0 0
    %58 = vperm.xlu0 %57, %v40
    %v59 = vpop.permute.xlu0 %58
    %vm61 = vcmask 261120
    %v63 = vsel %vm61, %v33, 0
    %v66 = vsel %vm61, %v34, 0
    %v69 = vsel %vm61, %v35, 0
    %v72 = vsel %vm61, %v36, 0
    %74 = vmatprep.subr.mxu0 0.0
    %75 = vmatpush1.msra.mxu0 %v29
    %76 = vmatprep.subr.mxu0 0.0
    %77 = vmatpush1.msra.mxu0 %v30
    %78 = vmatprep.subr.mxu0 0.0
    %79 = vmatpush1.msra.mxu0 %v31
    %80 = vmatprep.subr.mxu0 0.0
    %81 = vmatpush1.msra.mxu0 %v32
    %82 = vmatprep.subr.mxu0 0.0
    %83 = vmatpush1.msra.mxu0 0.0
    %84 = vmatprep.subr.mxu0 0.0
    %85 = vmatpush1.msra.mxu0 0.0
    %86 = vmatprep.subr.mxu0 0.0
    %87 = vmatpush1.msra.mxu0 0.0
    %88 = vmatprep.subr.mxu0 0.0
    %89 = vmatpush1.msra.mxu0 0.0
    %90 = vmatprep.subr.mxu0 0.0
    %91 = vmatpush1.msra.mxu0 0.0
    %92 = vmatprep.subr.mxu0 0.0
    %93 = vmatpush1.msra.mxu0 0.0
    %94 = vmatprep.subr.mxu0 0.0
    %95 = vmatpush1.msra.mxu0 0.0
    %96 = vmatprep.subr.mxu0 0.0
    %97 = vmatpush1.msra.mxu0 0.0
    %98 = vmatprep.subr.mxu0 0.0
    %99 = vmatpush1.msra.mxu0 0.0
    %100 = vmatprep.subr.mxu0 0.0
    %101 = vmatpush1.msra.mxu0 0.0
    %102 = vmatprep.subr.mxu0 0.0
    %103 = vmatpush1.msra.mxu0 0.0
    %104 = vmatprep.subr.mxu0 0.0
    %105 = vmatpush1.msra.mxu0 0.0
    %106 = vmatprep.subr.mxu0 0.0
    %107 = vmatpush1.msra.mxu0 0.0
    %108 = vmatprep.subr.mxu0 0.0
    %109 = vmatpush1.msra.mxu0 0.0
    %110 = vmatprep.subr.mxu0 0.0
    %111 = vmatpush1.msra.mxu0 0.0
    %112 = vmatprep.subr.mxu0 0.0
    %113 = vmatpush1.msra.mxu0 0.0
    %114 = vmatprep.subr.mxu0 0.0
    %115 = vmatpush1.msra.mxu0 0.0
    %116 = vmatprep.subr.mxu0 0.0
    %117 = vmatpush1.msra.mxu0 0.0
    %118 = vmatprep.subr.mxu0 0.0
    %119 = vmatpush1.msra.mxu0 0.0
    %120 = vmatprep.subr.mxu0 0.0
    %121 = vmatpush1.msra.mxu0 0.0
    %122 = vmatprep.subr.mxu0 0.0
    %123 = vmatpush1.msra.mxu0 0.0
    %124 = vmatprep.subr.mxu0 0.0
    %125 = vmatpush1.msra.mxu0 0.0
    %126 = vmatprep.subr.mxu0 0.0
    %127 = vmatpush1.msra.mxu0 0.0
    %128 = vmatprep.subr.mxu0 0.0
    %129 = vmatpush1.msra.mxu0 0.0
    %130 = vmatprep.subr.mxu0 0.0
    %131 = vmatpush1.msra.mxu0 0.0
    %132 = vmatprep.subr.mxu0 0.0
    %133 = vmatpush1.msra.mxu0 0.0
    %134 = vmatprep.subr.mxu0 0.0
    %135 = vmatpush1.msra.mxu0 0.0
    %136 = vmatprep.subr.mxu0 0.0
    %137 = vmatpush1.msra.mxu0 0.0
    %138 = vmatprep.mubr.f32.mxu0 0.0
    %139 = vmatmul.mubr.f32.gmra.mrb[0].mxu0 %v63
    %v140 = vpop.f32.mrb[0].mxu0
    %v141 = vadd.f32 %v44, %v140
    %v142 = vpop.f32.mrb[0].mxu0
    %143 = vmatprep.mubr.f32.mxu0 0.0
    %144 = vmatmul.mubr.f32.gmra.mrb[0].mxu0 %v66
    %v145 = vpop.f32.mrb[0].mxu0
    %v146 = vadd.f32 %v49, %v145
    %v147 = vpop.f32.mrb[0].mxu0
    %148 = vmatprep.mubr.f32.mxu0 0.0
    %149 = vmatmul.mubr.f32.gmra.mrb[0].mxu0 %v69
    %v150 = vpop.f32.mrb[0].mxu0
    %v151 = vadd.f32 %v54, %v150
    %v152 = vpop.f32.mrb[0].mxu0
    %153 = vmatprep.mubr.f32.mxu0 0.0
    %154 = vmatmul.mubr.f32.gmra.mrb[0].mxu0 %v72
    %v155 = vpop.f32.mrb[0].mxu0
    %v156 = vadd.f32 %v59, %v155
    %v157 = vpop.f32.mrb[0].mxu0
    %158 = vdwg.mxu0
    %v159 = vmul.f32 %v141, 0.01
    %v160 = vmul.f32 %v146, 0.01
    %v161 = vmul.f32 %v151, 0.01
    %v162 = vmul.f32 %v156, 0.01
    %v163 = vmax.f32 %v141, %v159
    %v164 = vmax.f32 %v146, %v160
    %v165 = vmax.f32 %v151, %v161
    %v166 = vmax.f32 %v156, %v162
    %s167 = scalar_lea.vmem %s1, 32
    %v168 = vld [vmem:[%s167] sm:$0xff]
    %v169 = vld [vmem:[%s167 + $0x8] sm:$0xff]
    %v170 = vld [vmem:[%s167 + $0x10] sm:$0xff]
    %v171 = vld [vmem:[%s167 + $0x18] sm:$0xff]
    %s172 = scalar_lea.vmem %s2, 32
    %v173 = vld [vmem:[%s172] sm:$0xff]
    %v174 = vld [vmem:[%s172 + $0x8] sm:$0xff]
    %v175 = vld [vmem:[%s172 + $0x10] sm:$0xff]
    %v176 = vld [vmem:[%s172 + $0x18] sm:$0xff]
    %178 = vset.pattern.permute.xlu0 0
    %179 = vperm.xlu0 %178, %v173
    %v180 = vpop.permute.xlu0 %179
    %183 = vset.pattern.permute.xlu0 0
    %184 = vperm.xlu0 %183, %v174
    %v185 = vpop.permute.xlu0 %184
    %188 = vset.pattern.permute.xlu0 0
    %189 = vperm.xlu0 %188, %v175
    %v190 = vpop.permute.xlu0 %189
    %193 = vset.pattern.permute.xlu0 0
    %194 = vperm.xlu0 %193, %v176
    %v195 = vpop.permute.xlu0 %194
    %v198 = vsel %vm61, %v168, 0
    %v201 = vsel %vm61, %v169, 0
    %v204 = vsel %vm61, %v170, 0
    %v207 = vsel %vm61, %v171, 0
    %209 = vmatprep.subr.mxu0 0.0
    %210 = vmatpush1.msra.mxu0 %v163
    %211 = vmatprep.subr.mxu0 0.0
    %212 = vmatpush1.msra.mxu0 %v164
    %213 = vmatprep.subr.mxu0 0.0
    %214 = vmatpush1.msra.mxu0 %v165
    %215 = vmatprep.subr.mxu0 0.0
    %216 = vmatpush1.msra.mxu0 %v166
    %217 = vmatprep.subr.mxu0 0.0
    %218 = vmatpush1.msra.mxu0 0.0
    %219 = vmatprep.subr.mxu0 0.0
    %220 = vmatpush1.msra.mxu0 0.0
    %221 = vmatprep.subr.mxu0 0.0
    %222 = vmatpush1.msra.mxu0 0.0
    %223 = vmatprep.subr.mxu0 0.0
    %224 = vmatpush1.msra.mxu0 0.0
    %225 = vmatprep.subr.mxu0 0.0
    %226 = vmatpush1.msra.mxu0 0.0
    %227 = vmatprep.subr.mxu0 0.0
    %228 = vmatpush1.msra.mxu0 0.0
    %229 = vmatprep.subr.mxu0 0.0
    %230 = vmatpush1.msra.mxu0 0.0
    %231 = vmatprep.subr.mxu0 0.0
    %232 = vmatpush1.msra.mxu0 0.0
    %233 = vmatprep.subr.mxu0 0.0
    %234 = vmatpush1.msra.mxu0 0.0
    %235 = vmatprep.subr.mxu0 0.0
    %236 = vmatpush1.msra.mxu0 0.0
    %237 = vmatprep.subr.mxu0 0.0
    %238 = vmatpush1.msra.mxu0 0.0
    %239 = vmatprep.subr.mxu0 0.0
    %240 = vmatpush1.msra.mxu0 0.0
    %241 = vmatprep.subr.mxu0 0.0
    %242 = vmatpush1.msra.mxu0 0.0
    %243 = vmatprep.subr.mxu0 0.0
    %244 = vmatpush1.msra.mxu0 0.0
    %245 = vmatprep.subr.mxu0 0.0
    %246 = vmatpush1.msra.mxu0 0.0
    %247 = vmatprep.subr.mxu0 0.0
    %248 = vmatpush1.msra.mxu0 0.0
    %249 = vmatprep.subr.mxu0 0.0
    %250 = vmatpush1.msra.mxu0 0.0
    %251 = vmatprep.subr.mxu0 0.0
    %252 = vmatpush1.msra.mxu0 0.0
    %253 = vmatprep.subr.mxu0 0.0
    %254 = vmatpush1.msra.mxu0 0.0
    %255 = vmatprep.subr.mxu0 0.0
    %256 = vmatpush1.msra.mxu0 0.0
    %257 = vmatprep.subr.mxu0 0.0
    %258 = vmatpush1.msra.mxu0 0.0
    %259 = vmatprep.subr.mxu0 0.0
    %260 = vmatpush1.msra.mxu0 0.0
    %261 = vmatprep.subr.mxu0 0.0
    %262 = vmatpush1.msra.mxu0 0.0
    %263 = vmatprep.subr.mxu0 0.0
    %264 = vmatpush1.msra.mxu0 0.0
    %265 = vmatprep.subr.mxu0 0.0
    %266 = vmatpush1.msra.mxu0 0.0
    %267 = vmatprep.subr.mxu0 0.0
    %268 = vmatpush1.msra.mxu0 0.0
    %269 = vmatprep.subr.mxu0 0.0
    %270 = vmatpush1.msra.mxu0 0.0
    %271 = vmatprep.subr.mxu0 0.0
    %272 = vmatpush1.msra.mxu0 0.0
    %273 = vmatprep.mubr.f32.mxu0 0.0
    %274 = vmatmul.mubr.f32.gmra.mrb[0].mxu0 %v198
    %v275 = vpop.f32.mrb[0].mxu0
    %v276 = vadd.f32 %v180, %v275
    %v277 = vpop.f32.mrb[0].mxu0
    %278 = vmatprep.mubr.f32.mxu0 0.0
    %279 = vmatmul.mubr.f32.gmra.mrb[0].mxu0 %v201
    %v280 = vpop.f32.mrb[0].mxu0
    %v281 = vadd.f32 %v185, %v280
    %v282 = vpop.f32.mrb[0].mxu0
    %283 = vmatprep.mubr.f32.mxu0 0.0
    %284 = vmatmul.mubr.f32.gmra.mrb[0].mxu0 %v204
    %v285 = vpop.f32.mrb[0].mxu0
    %v286 = vadd.f32 %v190, %v285
    %v287 = vpop.f32.mrb[0].mxu0
    %288 = vmatprep.mubr.f32.mxu0 0.0
    %289 = vmatmul.mubr.f32.gmra.mrb[0].mxu0 %v207
    %v290 = vpop.f32.mrb[0].mxu0
    %v291 = vadd.f32 %v195, %v290
    %v292 = vpop.f32.mrb[0].mxu0
    %293 = vdwg.mxu0
    %v294 = vmul.f32 %v276, 0.01
    %v295 = vmul.f32 %v281, 0.01
    %v296 = vmul.f32 %v286, 0.01
    %v297 = vmul.f32 %v291, 0.01
    %v298 = vmax.f32 %v276, %v294
    %v299 = vmax.f32 %v281, %v295
    %v300 = vmax.f32 %v286, %v296
    %v301 = vmax.f32 %v291, %v297
    %s302 = scalar_lea.vmem %s1, 64
    %v303 = vld [vmem:[%s302] sm:$0xff]
    %v304 = vld [vmem:[%s302 + $0x8] sm:$0xff]
    %v305 = vld [vmem:[%s302 + $0x10] sm:$0xff]
    %v306 = vld [vmem:[%s302 + $0x18] sm:$0xff]
    %s307 = scalar_lea.vmem %s2, 64
    %v308 = vld [vmem:[%s307] sm:$0xff]
    %v309 = vld [vmem:[%s307 + $0x8] sm:$0xff]
    %v310 = vld [vmem:[%s307 + $0x10] sm:$0xff]
    %v311 = vld [vmem:[%s307 + $0x18] sm:$0xff]
    %313 = vset.pattern.permute.xlu0 0
    %314 = vperm.xlu0 %313, %v308
    %v315 = vpop.permute.xlu0 %314
    %318 = vset.pattern.permute.xlu0 0
    %319 = vperm.xlu0 %318, %v309
    %v320 = vpop.permute.xlu0 %319
    %323 = vset.pattern.permute.xlu0 0
    %324 = vperm.xlu0 %323, %v310
    %v325 = vpop.permute.xlu0 %324
    %328 = vset.pattern.permute.xlu0 0
    %329 = vperm.xlu0 %328, %v311
    %v330 = vpop.permute.xlu0 %329
    %v333 = vsel %vm61, %v303, 0
    %v336 = vsel %vm61, %v304, 0
    %v339 = vsel %vm61, %v305, 0
    %v342 = vsel %vm61, %v306, 0
    %344 = vmatprep.subr.mxu0 0.0
    %345 = vmatpush1.msra.mxu0 %v298
    %346 = vmatprep.subr.mxu0 0.0
    %347 = vmatpush1.msra.mxu0 %v299
    %348 = vmatprep.subr.mxu0 0.0
    %349 = vmatpush1.msra.mxu0 %v300
    %350 = vmatprep.subr.mxu0 0.0
    %351 = vmatpush1.msra.mxu0 %v301
    %352 = vmatprep.subr.mxu0 0.0
    %353 = vmatpush1.msra.mxu0 0.0
    %354 = vmatprep.subr.mxu0 0.0
    %355 = vmatpush1.msra.mxu0 0.0
    %356 = vmatprep.subr.mxu0 0.0
    %357 = vmatpush1.msra.mxu0 0.0
    %358 = vmatprep.subr.mxu0 0.0
    %359 = vmatpush1.msra.mxu0 0.0
    %360 = vmatprep.subr.mxu0 0.0
    %361 = vmatpush1.msra.mxu0 0.0
    %362 = vmatprep.subr.mxu0 0.0
    %363 = vmatpush1.msra.mxu0 0.0
    %364 = vmatprep.subr.mxu0 0.0
    %365 = vmatpush1.msra.mxu0 0.0
    %366 = vmatprep.subr.mxu0 0.0
    %367 = vmatpush1.msra.mxu0 0.0
    %368 = vmatprep.subr.mxu0 0.0
    %369 = vmatpush1.msra.mxu0 0.0
    %370 = vmatprep.subr.mxu0 0.0
    %371 = vmatpush1.msra.mxu0 0.0
    %372 = vmatprep.subr.mxu0 0.0
    %373 = vmatpush1.msra.mxu0 0.0
    %374 = vmatprep.subr.mxu0 0.0
    %375 = vmatpush1.msra.mxu0 0.0
    %376 = vmatprep.subr.mxu0 0.0
    %377 = vmatpush1.msra.mxu0 0.0
    %378 = vmatprep.subr.mxu0 0.0
    %379 = vmatpush1.msra.mxu0 0.0
    %380 = vmatprep.subr.mxu0 0.0
    %381 = vmatpush1.msra.mxu0 0.0
    %382 = vmatprep.subr.mxu0 0.0
    %383 = vmatpush1.msra.mxu0 0.0
    %384 = vmatprep.subr.mxu0 0.0
    %385 = vmatpush1.msra.mxu0 0.0
    %386 = vmatprep.subr.mxu0 0.0
    %387 = vmatpush1.msra.mxu0 0.0
    %388 = vmatprep.subr.mxu0 0.0
    %389 = vmatpush1.msra.mxu0 0.0
    %390 = vmatprep.subr.mxu0 0.0
    %391 = vmatpush1.msra.mxu0 0.0
    %392 = vmatprep.subr.mxu0 0.0
    %393 = vmatpush1.msra.mxu0 0.0
    %394 = vmatprep.subr.mxu0 0.0
    %395 = vmatpush1.msra.mxu0 0.0
    %396 = vmatprep.subr.mxu0 0.0
    %397 = vmatpush1.msra.mxu0 0.0
    %398 = vmatprep.subr.mxu0 0.0
    %399 = vmatpush1.msra.mxu0 0.0
    %400 = vmatprep.subr.mxu0 0.0
    %401 = vmatpush1.msra.mxu0 0.0
    %402 = vmatprep.subr.mxu0 0.0
    %403 = vmatpush1.msra.mxu0 0.0
    %404 = vmatprep.subr.mxu0 0.0
    %405 = vmatpush1.msra.mxu0 0.0
    %406 = vmatprep.subr.mxu0 0.0
    %407 = vmatpush1.msra.mxu0 0.0
    %408 = vmatprep.mubr.f32.mxu0 0.0
    %409 = vmatmul.mubr.f32.gmra.mrb[0].mxu0 %v333
    %v410 = vpop.f32.mrb[0].mxu0
    %v411 = vadd.f32 %v315, %v410
    %v412 = vpop.f32.mrb[0].mxu0
    %413 = vmatprep.mubr.f32.mxu0 0.0
    %414 = vmatmul.mubr.f32.gmra.mrb[0].mxu0 %v336
    %v415 = vpop.f32.mrb[0].mxu0
    %v416 = vadd.f32 %v320, %v415
    %v417 = vpop.f32.mrb[0].mxu0
    %418 = vmatprep.mubr.f32.mxu0 0.0
    %419 = vmatmul.mubr.f32.gmra.mrb[0].mxu0 %v339
    %v420 = vpop.f32.mrb[0].mxu0
    %v421 = vadd.f32 %v325, %v420
    %v422 = vpop.f32.mrb[0].mxu0
    %423 = vmatprep.mubr.f32.mxu0 0.0
    %424 = vmatmul.mubr.f32.gmra.mrb[0].mxu0 %v342
    %v425 = vpop.f32.mrb[0].mxu0
    %v426 = vadd.f32 %v330, %v425
    %v427 = vpop.f32.mrb[0].mxu0
    %428 = vdwg.mxu0
    %v429 = vsub.f32 0.0, %v411
    %v430 = vsub.f32 0.0, %v416
    %v431 = vsub.f32 0.0, %v421
    %v432 = vsub.f32 0.0, %v426
    %v433 = vmul.f32 %v429, 1.442695
    %v434 = vpow.pop %v433
    %v435 = vmul.f32 %v430, 1.442695
    %v436 = vpow.pop %v435
    %v437 = vmul.f32 %v431, 1.442695
    %v438 = vpow.pop %v437
    %v439 = vmul.f32 %v432, 1.442695
    %v440 = vpow.pop %v439
    %v441 = vadd.f32 %v434, 1.0
    %v442 = vadd.f32 %v436, 1.0
    %v443 = vadd.f32 %v438, 1.0
    %v444 = vadd.f32 %v440, 1.0
    %v445 = vrcp.pop %v441
    %v446 = vrcp.pop %v442
    %v447 = vrcp.pop %v443
    %v448 = vrcp.pop %v444
    %s449 = scalar_lea.vmem %s1, 96
    %v450 = vld [vmem:[%s449] sm:$0xff]
    %v451 = vld [vmem:[%s449 + $0x8] sm:$0xff]
    %v452 = vld [vmem:[%s449 + $0x10] sm:$0xff]
    %v453 = vld [vmem:[%s449 + $0x18] sm:$0xff]
    %s454 = scalar_lea.vmem %s2, 96
    %v455 = vld [vmem:[%s454] sm:$0xff]
    %v456 = vld [vmem:[%s454 + $0x8] sm:$0xff]
    %v457 = vld [vmem:[%s454 + $0x10] sm:$0xff]
    %v458 = vld [vmem:[%s454 + $0x18] sm:$0xff]
    %460 = vset.pattern.permute.xlu0 0
    %461 = vperm.xlu0 %460, %v455
    %v462 = vpop.permute.xlu0 %461
    %465 = vset.pattern.permute.xlu0 0
    %466 = vperm.xlu0 %465, %v456
    %v467 = vpop.permute.xlu0 %466
    %470 = vset.pattern.permute.xlu0 0
    %471 = vperm.xlu0 %470, %v457
    %v472 = vpop.permute.xlu0 %471
    %475 = vset.pattern.permute.xlu0 0
    %476 = vperm.xlu0 %475, %v458
    %v477 = vpop.permute.xlu0 %476
    %v480 = vsel %vm61, %v450, 0
    %v483 = vsel %vm61, %v451, 0
    %v486 = vsel %vm61, %v452, 0
    %v489 = vsel %vm61, %v453, 0
    %491 = vmatprep.subr.mxu0 0.0
    %492 = vmatpush1.msra.mxu0 %v445
    %493 = vmatprep.subr.mxu0 0.0
    %494 = vmatpush1.msra.mxu0 %v446
    %495 = vmatprep.subr.mxu0 0.0
    %496 = vmatpush1.msra.mxu0 %v447
    %497 = vmatprep.subr.mxu0 0.0
    %498 = vmatpush1.msra.mxu0 %v448
    %499 = vmatprep.subr.mxu0 0.0
    %500 = vmatpush1.msra.mxu0 0.0
    %501 = vmatprep.subr.mxu0 0.0
    %502 = vmatpush1.msra.mxu0 0.0
    %503 = vmatprep.subr.mxu0 0.0
    %504 = vmatpush1.msra.mxu0 0.0
    %505 = vmatprep.subr.mxu0 0.0
    %506 = vmatpush1.msra.mxu0 0.0
    %507 = vmatprep.subr.mxu0 0.0
    %508 = vmatpush1.msra.mxu0 0.0
    %509 = vmatprep.subr.mxu0 0.0
    %510 = vmatpush1.msra.mxu0 0.0
    %511 = vmatprep.subr.mxu0 0.0
    %512 = vmatpush1.msra.mxu0 0.0
    %513 = vmatprep.subr.mxu0 0.0
    %514 = vmatpush1.msra.mxu0 0.0
    %515 = vmatprep.subr.mxu0 0.0
    %516 = vmatpush1.msra.mxu0 0.0
    %517 = vmatprep.subr.mxu0 0.0
    %518 = vmatpush1.msra.mxu0 0.0
    %519 = vmatprep.subr.mxu0 0.0
    %520 = vmatpush1.msra.mxu0 0.0
    %521 = vmatprep.subr.mxu0 0.0
    %522 = vmatpush1.msra.mxu0 0.0
    %523 = vmatprep.subr.mxu0 0.0
    %524 = vmatpush1.msra.mxu0 0.0
    %525 = vmatprep.subr.mxu0 0.0
    %526 = vmatpush1.msra.mxu0 0.0
    %527 = vmatprep.subr.mxu0 0.0
    %528 = vmatpush1.msra.mxu0 0.0
    %529 = vmatprep.subr.mxu0 0.0
    %530 = vmatpush1.msra.mxu0 0.0
    %531 = vmatprep.subr.mxu0 0.0
    %532 = vmatpush1.msra.mxu0 0.0
    %533 = vmatprep.subr.mxu0 0.0
    %534 = vmatpush1.msra.mxu0 0.0
    %535 = vmatprep.subr.mxu0 0.0
    %536 = vmatpush1.msra.mxu0 0.0
    %537 = vmatprep.subr.mxu0 0.0
    %538 = vmatpush1.msra.mxu0 0.0
    %539 = vmatprep.subr.mxu0 0.0
    %540 = vmatpush1.msra.mxu0 0.0
    %541 = vmatprep.subr.mxu0 0.0
    %542 = vmatpush1.msra.mxu0 0.0
    %543 = vmatprep.subr.mxu0 0.0
    %544 = vmatpush1.msra.mxu0 0.0
    %545 = vmatprep.subr.mxu0 0.0
    %546 = vmatpush1.msra.mxu0 0.0
    %547 = vmatprep.subr.mxu0 0.0
    %548 = vmatpush1.msra.mxu0 0.0
    %549 = vmatprep.subr.mxu0 0.0
    %550 = vmatpush1.msra.mxu0 0.0
    %551 = vmatprep.subr.mxu0 0.0
    %552 = vmatpush1.msra.mxu0 0.0
    %553 = vmatprep.subr.mxu0 0.0
    %554 = vmatpush1.msra.mxu0 0.0
    %555 = vmatprep.mubr.f32.mxu0 0.0
    %556 = vmatmul.mubr.f32.gmra.mrb[0].mxu0 %v480
    %v557 = vpop.f32.mrb[0].mxu0
    %v558 = vadd.f32 %v462, %v557
    %v559 = vpop.f32.mrb[0].mxu0
    %560 = vmatprep.mubr.f32.mxu0 0.0
    %561 = vmatmul.mubr.f32.gmra.mrb[0].mxu0 %v483
    %v562 = vpop.f32.mrb[0].mxu0
    %v563 = vadd.f32 %v467, %v562
    %v564 = vpop.f32.mrb[0].mxu0
    %565 = vmatprep.mubr.f32.mxu0 0.0
    %566 = vmatmul.mubr.f32.gmra.mrb[0].mxu0 %v486
    %v567 = vpop.f32.mrb[0].mxu0
    %v568 = vadd.f32 %v472, %v567
    %v569 = vpop.f32.mrb[0].mxu0
    %570 = vmatprep.mubr.f32.mxu0 0.0
    %571 = vmatmul.mubr.f32.gmra.mrb[0].mxu0 %v489
    %v572 = vpop.f32.mrb[0].mxu0
    %v573 = vadd.f32 %v477, %v572
    %v574 = vpop.f32.mrb[0].mxu0
    %575 = vdwg.mxu0
    %v576 = vmul.f32 %v558, 0.01
    %v577 = vmul.f32 %v563, 0.01
    %v578 = vmul.f32 %v568, 0.01
    %v579 = vmul.f32 %v573, 0.01
    %v580 = vmax.f32 %v558, %v576
    %v581 = vmax.f32 %v563, %v577
    %v582 = vmax.f32 %v568, %v578
    %v583 = vmax.f32 %v573, %v579
    %s584 = scalar_lea.vmem %s1, 128
    %v585 = vld [vmem:[%s584] sm:$0xff]
    %v586 = vld [vmem:[%s584 + $0x8] sm:$0xff]
    %v587 = vld [vmem:[%s584 + $0x10] sm:$0xff]
    %v588 = vld [vmem:[%s584 + $0x18] sm:$0xff]
    %s589 = scalar_lea.vmem %s2, 128
    %v590 = vld [vmem:[%s589] sm:$0xff]
    %v591 = vld [vmem:[%s589 + $0x8] sm:$0xff]
    %v592 = vld [vmem:[%s589 + $0x10] sm:$0xff]
    %v593 = vld [vmem:[%s589 + $0x18] sm:$0xff]
    %595 = vset.pattern.permute.xlu0 0
    %596 = vperm.xlu0 %595, %v590
    %v597 = vpop.permute.xlu0 %596
    %600 = vset.pattern.permute.xlu0 0
    %601 = vperm.xlu0 %600, %v591
    %v602 = vpop.permute.xlu0 %601
    %605 = vset.pattern.permute.xlu0 0
    %606 = vperm.xlu0 %605, %v592
    %v607 = vpop.permute.xlu0 %606
    %610 = vset.pattern.permute.xlu0 0
    %611 = vperm.xlu0 %610, %v593
    %v612 = vpop.permute.xlu0 %611
    %v615 = vsel %vm61, %v585, 0
    %v618 = vsel %vm61, %v586, 0
    %v621 = vsel %vm61, %v587, 0
    %v624 = vsel %vm61, %v588, 0
    %626 = vmatprep.subr.mxu0 0.0
    %627 = vmatpush1.msra.mxu0 %v580
    %628 = vmatprep.subr.mxu0 0.0
    %629 = vmatpush1.msra.mxu0 %v581
    %630 = vmatprep.subr.mxu0 0.0
    %631 = vmatpush1.msra.mxu0 %v582
    %632 = vmatprep.subr.mxu0 0.0
    %633 = vmatpush1.msra.mxu0 %v583
    %634 = vmatprep.subr.mxu0 0.0
    %635 = vmatpush1.msra.mxu0 0.0
    %636 = vmatprep.subr.mxu0 0.0
    %637 = vmatpush1.msra.mxu0 0.0
    %638 = vmatprep.subr.mxu0 0.0
    %639 = vmatpush1.msra.mxu0 0.0
    %640 = vmatprep.subr.mxu0 0.0
    %641 = vmatpush1.msra.mxu0 0.0
    %642 = vmatprep.subr.mxu0 0.0
    %643 = vmatpush1.msra.mxu0 0.0
    %644 = vmatprep.subr.mxu0 0.0
    %645 = vmatpush1.msra.mxu0 0.0
    %646 = vmatprep.subr.mxu0 0.0
    %647 = vmatpush1.msra.mxu0 0.0
    %648 = vmatprep.subr.mxu0 0.0
    %649 = vmatpush1.msra.mxu0 0.0
    %650 = vmatprep.subr.mxu0 0.0
    %651 = vmatpush1.msra.mxu0 0.0
    %652 = vmatprep.subr.mxu0 0.0
    %653 = vmatpush1.msra.mxu0 0.0
    %654 = vmatprep.subr.mxu0 0.0
    %655 = vmatpush1.msra.mxu0 0.0
    %656 = vmatprep.subr.mxu0 0.0
    %657 = vmatpush1.msra.mxu0 0.0
    %658 = vmatprep.subr.mxu0 0.0
    %659 = vmatpush1.msra.mxu0 0.0
    %660 = vmatprep.subr.mxu0 0.0
    %661 = vmatpush1.msra.mxu0 0.0
    %662 = vmatprep.subr.mxu0 0.0
    %663 = vmatpush1.msra.mxu0 0.0
    %664 = vmatprep.subr.mxu0 0.0
    %665 = vmatpush1.msra.mxu0 0.0
    %666 = vmatprep.subr.mxu0 0.0
    %667 = vmatpush1.msra.mxu0 0.0
    %668 = vmatprep.subr.mxu0 0.0
    %669 = vmatpush1.msra.mxu0 0.0
    %670 = vmatprep.subr.mxu0 0.0
    %671 = vmatpush1.msra.mxu0 0.0
    %672 = vmatprep.subr.mxu0 0.0
    %673 = vmatpush1.msra.mxu0 0.0
    %674 = vmatprep.subr.mxu0 0.0
    %675 = vmatpush1.msra.mxu0 0.0
    %676 = vmatprep.subr.mxu0 0.0
    %677 = vmatpush1.msra.mxu0 0.0
    %678 = vmatprep.subr.mxu0 0.0
    %679 = vmatpush1.msra.mxu0 0.0
    %680 = vmatprep.subr.mxu0 0.0
    %681 = vmatpush1.msra.mxu0 0.0
    %682 = vmatprep.subr.mxu0 0.0
    %683 = vmatpush1.msra.mxu0 0.0
    %684 = vmatprep.subr.mxu0 0.0
    %685 = vmatpush1.msra.mxu0 0.0
    %686 = vmatprep.subr.mxu0 0.0
    %687 = vmatpush1.msra.mxu0 0.0
    %688 = vmatprep.subr.mxu0 0.0
    %689 = vmatpush1.msra.mxu0 0.0
    %690 = vmatprep.mubr.f32.mxu0 0.0
    %691 = vmatmul.mubr.f32.gmra.mrb[0].mxu0 %v615
    %v692 = vpop.f32.mrb[0].mxu0
    %v693 = vadd.f32 %v597, %v692
    %v694 = vpop.f32.mrb[0].mxu0
    %695 = vmatprep.mubr.f32.mxu0 0.0
    %696 = vmatmul.mubr.f32.gmra.mrb[0].mxu0 %v618
    %v697 = vpop.f32.mrb[0].mxu0
    %v698 = vadd.f32 %v602, %v697
    %v699 = vpop.f32.mrb[0].mxu0
    %700 = vmatprep.mubr.f32.mxu0 0.0
    %701 = vmatmul.mubr.f32.gmra.mrb[0].mxu0 %v621
    %v702 = vpop.f32.mrb[0].mxu0
    %v703 = vadd.f32 %v607, %v702
    %v704 = vpop.f32.mrb[0].mxu0
    %705 = vmatprep.mubr.f32.mxu0 0.0
    %706 = vmatmul.mubr.f32.gmra.mrb[0].mxu0 %v624
    %v707 = vpop.f32.mrb[0].mxu0
    %v708 = vadd.f32 %v612, %v707
    %v709 = vpop.f32.mrb[0].mxu0
    %710 = vdwg.mxu0
    %v711 = vmul.f32 %v693, 0.01
    %v712 = vmul.f32 %v698, 0.01
    %v713 = vmul.f32 %v703, 0.01
    %v714 = vmul.f32 %v708, 0.01
    %v715 = vmax.f32 %v693, %v711
    %v716 = vmax.f32 %v698, %v712
    %v717 = vmax.f32 %v703, %v713
    %v718 = vmax.f32 %v708, %v714
    %s719 = scalar_lea.vmem %s1, 160
    %v720 = vld [vmem:[%s719] sm:$0xff]
    %v721 = vld [vmem:[%s719 + $0x8] sm:$0xff]
    %v722 = vld [vmem:[%s719 + $0x10] sm:$0xff]
    %v723 = vld [vmem:[%s719 + $0x18] sm:$0xff]
    %s724 = scalar_lea.vmem %s2, 160
    %v725 = vld [vmem:[%s724] sm:$0xff]
    %v726 = vld [vmem:[%s724 + $0x8] sm:$0xff]
    %v727 = vld [vmem:[%s724 + $0x10] sm:$0xff]
    %v728 = vld [vmem:[%s724 + $0x18] sm:$0xff]
    %730 = vset.pattern.permute.xlu0 0
    %731 = vperm.xlu0 %730, %v725
    %v732 = vpop.permute.xlu0 %731
    %735 = vset.pattern.permute.xlu0 0
    %736 = vperm.xlu0 %735, %v726
    %v737 = vpop.permute.xlu0 %736
    %740 = vset.pattern.permute.xlu0 0
    %741 = vperm.xlu0 %740, %v727
    %v742 = vpop.permute.xlu0 %741
    %744 = vset.pattern.permute.xlu0 0
    %745 = vperm.xlu0 %744, %v728
    %v746 = vpop.permute.xlu0 %745
    %v748 = vsel %vm61, %v720, 0
    %v751 = vsel %vm61, %v721, 0
    %v754 = vsel %vm61, %v722, 0
    %v757 = vsel %vm61, %v723, 0
    %759 = vmatprep.subr.mxu0 0.0
    %760 = vmatpush1.msra.mxu0 %v715
    %761 = vmatprep.subr.mxu0 0.0
    %762 = vmatpush1.msra.mxu0 %v716
    %763 = vmatprep.subr.mxu0 0.0
    %764 = vmatpush1.msra.mxu0 %v717
    %765 = vmatprep.subr.mxu0 0.0
    %766 = vmatpush1.msra.mxu0 %v718
    %767 = vmatprep.subr.mxu0 0.0
    %768 = vmatpush1.msra.mxu0 0.0
    %769 = vmatprep.subr.mxu0 0.0
    %770 = vmatpush1.msra.mxu0 0.0
    %771 = vmatprep.subr.mxu0 0.0
    %772 = vmatpush1.msra.mxu0 0.0
    %773 = vmatprep.subr.mxu0 0.0
    %774 = vmatpush1.msra.mxu0 0.0
    %775 = vmatprep.subr.mxu0 0.0
    %776 = vmatpush1.msra.mxu0 0.0
    %777 = vmatprep.subr.mxu0 0.0
    %778 = vmatpush1.msra.mxu0 0.0
    %779 = vmatprep.subr.mxu0 0.0
    %780 = vmatpush1.msra.mxu0 0.0
    %781 = vmatprep.subr.mxu0 0.0
    %782 = vmatpush1.msra.mxu0 0.0
    %783 = vmatprep.subr.mxu0 0.0
    %784 = vmatpush1.msra.mxu0 0.0
    %785 = vmatprep.subr.mxu0 0.0
    %786 = vmatpush1.msra.mxu0 0.0
    %787 = vmatprep.subr.mxu0 0.0
    %788 = vmatpush1.msra.mxu0 0.0
    %789 = vmatprep.subr.mxu0 0.0
    %790 = vmatpush1.msra.mxu0 0.0
    %791 = vmatprep.subr.mxu0 0.0
    %792 = vmatpush1.msra.mxu0 0.0
    %793 = vmatprep.subr.mxu0 0.0
    %794 = vmatpush1.msra.mxu0 0.0
    %795 = vmatprep.subr.mxu0 0.0
    %796 = vmatpush1.msra.mxu0 0.0
    %797 = vmatprep.subr.mxu0 0.0
    %798 = vmatpush1.msra.mxu0 0.0
    %799 = vmatprep.subr.mxu0 0.0
    %800 = vmatpush1.msra.mxu0 0.0
    %801 = vmatprep.subr.mxu0 0.0
    %802 = vmatpush1.msra.mxu0 0.0
    %803 = vmatprep.subr.mxu0 0.0
    %804 = vmatpush1.msra.mxu0 0.0
    %805 = vmatprep.subr.mxu0 0.0
    %806 = vmatpush1.msra.mxu0 0.0
    %807 = vmatprep.subr.mxu0 0.0
    %808 = vmatpush1.msra.mxu0 0.0
    %809 = vmatprep.subr.mxu0 0.0
    %810 = vmatpush1.msra.mxu0 0.0
    %811 = vmatprep.subr.mxu0 0.0
    %812 = vmatpush1.msra.mxu0 0.0
    %813 = vmatprep.subr.mxu0 0.0
    %814 = vmatpush1.msra.mxu0 0.0
    %815 = vmatprep.subr.mxu0 0.0
    %816 = vmatpush1.msra.mxu0 0.0
    %817 = vmatprep.subr.mxu0 0.0
    %818 = vmatpush1.msra.mxu0 0.0
    %819 = vmatprep.subr.mxu0 0.0
    %820 = vmatpush1.msra.mxu0 0.0
    %821 = vmatprep.subr.mxu0 0.0
    %822 = vmatpush1.msra.mxu0 0.0
    %823 = vmatprep.mubr.f32.mxu0 0.0
    %824 = vmatmul.mubr.f32.gmra.mrb[0].mxu0 %v748
    %v825 = vpop.f32.mrb[0].mxu0
    %v826 = vadd.f32 %v732, %v825
    %v827 = vpop.f32.mrb[0].mxu0
    %828 = vmatprep.mubr.f32.mxu0 0.0
    %829 = vmatmul.mubr.f32.gmra.mrb[0].mxu0 %v751
    %v830 = vpop.f32.mrb[0].mxu0
    %v831 = vadd.f32 %v737, %v830
    %v832 = vpop.f32.mrb[0].mxu0
    %833 = vmatprep.mubr.f32.mxu0 0.0
    %834 = vmatmul.mubr.f32.gmra.mrb[0].mxu0 %v754
    %v835 = vpop.f32.mrb[0].mxu0
    %v836 = vpop.f32.mrb[0].mxu0
    %837 = vmatprep.mubr.f32.mxu0 0.0
    %838 = vmatmul.mubr.f32.gmra.mrb[0].mxu0 %v757
    %v839 = vpop.f32.mrb[0].mxu0
    %v840 = vpop.f32.mrb[0].mxu0
    %841 = vdwg.mxu0
    %v842 = vsub.f32 0.0, %v826
    %v843 = vsub.f32 0.0, %v831
    %v844 = vmul.f32 %v842, 1.442695
    %v845 = vpow.pop %v844
    %v846 = vmul.f32 %v843, 1.442695
    %v847 = vpow.pop %v846
    %v848 = vadd.f32 %v845, 1.0
    %v849 = vadd.f32 %v847, 1.0
    %v850 = vrcp.pop %v848
    %v851 = vrcp.pop %v849
    %852 = vst [vmem:[#allocation5] sm:$0xff] %v850
    %853 = vst [vmem:[#allocation5 + $0x8] sm:$0xff] %v851
    // Predicated region
    $region18: #{tpu_custom_call.1} parent=1 // pred_check
      _
    $region19: #{tpu_custom_call.1} parent=1 // pred_check_branch
      %855 = sbr.rel (0) target = $region21
    $region20: #{tpu_custom_call.1} parent=1 // pred_region
      %s857 = ssub.s32 256, 256
      %858 = vsyncadd [#allocation4], %s857
      %s859 = sshll.u32 [#allocation5], 4
      %s860 = int_to_ptr.vmem [resolvable:$true] %s859
      %865 = dma.vmem_to_hbm [thread:$0]  %s860, 256, %s3, [#allocation4], 128, 128, 8
    $region21: #{tpu_custom_call.1} parent=1 // pred_fallthru
      _
    // Predicated region
    $region22: #{tpu_custom_call.1} parent=1 // pred_check
      _
    $region23: #{tpu_custom_call.1} parent=1 // pred_check_branch
      %867 = sbr.rel (0) target = $region25
    $region24: #{tpu_custom_call.1} parent=1 // pred_region
      %868 = dma.done [#allocation4], 256
    $region25: #{tpu_custom_call.1} parent=1 // pred_fallthru
      _
    %869 = vsyncpa [#allocation3], 1
    %870 = vsyncpa [#allocation4], 1

</llo_original>
